<compile_context>
chip_gen: v5e
topology: v5e:2x2
jax: 0.10.0
libtpu: 0.0.40
codegen_flags: <defaults>
</compile_context>

<pallas_src>
import functools

import jax
import jax.numpy as jnp
from jax.experimental import pallas as pl
from jax.experimental.pallas import tpu as pltpu

BN_EPS = 1e-5


def _mlp_kernel(x_ref, w1_ref, gamma_ref, beta_ref, w2_ref, b2_ref, o_ref,
                h_acc, *, inv_b, b_valid, tk, x_resident):
    # x_ref:      (B_pad, D_in) bf16 if resident else (B_pad, tk) bf16
    # w1_ref:     (tk, th)      bf16
    # gamma/beta: (1, th)       f32
    # w2_ref:     (th, Dpc)     bf16
    # b2_ref:     (1, Dpc)      f32
    # o_ref:      (B_pad, Dpc)  f32  (resident across the whole (h, k) sweep)
    # h_acc:      (B_pad, th)   f32 scratch
    h_idx = pl.program_id(1)
    k_idx = pl.program_id(2)
    n_k = pl.num_programs(2)

    # Output block is resident across (h, k): seed it with the bias once per
    # D_out chunk and accumulate matmul-2 partials straight into it.
    @pl.when(jnp.logical_and(h_idx == 0, k_idx == 0))
    def _():
        o_ref[...] = jnp.zeros_like(o_ref) + b2_ref[...]

    @pl.when(k_idx == 0)
    def _():
        h_acc[...] = jnp.zeros_like(h_acc)

    if x_resident:
        if tk == x_ref.shape[1]:
            x_blk = x_ref[...]
        else:
            start = pl.multiple_of(k_idx * tk, tk)
            x_blk = x_ref[:, pl.ds(start, tk)]
    else:
        x_blk = x_ref[...]

    # Matmul-1 partial sum: bf16 MXU operands, f32 accumulation in VMEM.
    h_acc[...] += jnp.dot(x_blk, w1_ref[...], preferred_element_type=jnp.float32)

    @pl.when(k_idx == n_k - 1)
    def _():
        h = h_acc[...]                                   # (B_pad, th) f32
        # Two-pass batch stats: h_acc is resident so the extra sweep is cheap,
        # and it avoids the cancellation of the one-pass E[h^2]-E[h]^2 form.
        mean = jnp.sum(h, axis=0, keepdims=True) * inv_b
        centered = h - mean
        if b_valid != h.shape[0]:
            # Zero-padded batch rows must not contribute to the variance.
            row_ok = jax.lax.broadcasted_iota(jnp.int32, h.shape, 0) < b_valid
            centered = jnp.where(row_ok, centered, 0.0)
        var = jnp.sum(centered * centered, axis=0, keepdims=True) * inv_b
        # Fold BN into one FMA per element: a = relu(h * scale + shift).
        scale = gamma_ref[...] * jax.lax.rsqrt(var + BN_EPS)
        shift = beta_ref[...] - mean * scale
        a = jnp.maximum(h * scale + shift, 0.0)
        # Matmul-2 partial over this H tile into the bias-seeded output block.
        o_ref[...] += jnp.dot(a.astype(w2_ref.dtype), w2_ref[...],
                              preferred_element_type=jnp.float32)


def _round_up(x, m):
    return (x + m - 1) // m * m


def _vmem_capacity_bytes():
    try:
        return int(pltpu.get_tpu_info().vmem_capacity_bytes)
    except Exception:
        return 64 * 1024 * 1024          # conservative fallback (v7x per-TC)


def _tile_candidates(dim):
    cands = [dim]
    for t in (4096, 2048, 1024, 512, 256, 128):
        if t < dim and dim % t == 0:
            cands.append(t)
    return cands                          # descending; multiple of 128 or full dim


def _footprint_bytes(b_pad, d_in, tk, th, dpc, x_resident, w1_bufs):
    x_b = 2 * b_pad * (d_in if x_resident else tk) * 2       # bf16
    w1_b = w1_bufs * tk * th * 2
    gb_b = 2 * 2 * th * 4
    w2_b = 2 * th * dpc * 2
    b2_b = 2 * dpc * 4
    out_b = 2 * b_pad * dpc * 4                               # resident output block
    hacc_b = b_pad * th * 4
    return x_b + w1_b + gb_b + w2_b + b2_b + out_b + hacc_b


def prepare_params(w1, gamma, beta, w2, b2):
    """One-time weight prep (bf16 cast, lane-dense D_out pad, reshape): hoisted
    out of the forward path so it is not repaid on every call."""
    H = w1.shape[1]
    D_out = w2.shape[1]
    Dp = _round_up(max(D_out, 128), 128)
    w1b = w1.astype(jnp.bfloat16)
    w2b = w2.astype(jnp.bfloat16)
    b2f = b2.astype(jnp.float32)
    if Dp != D_out:
        w2b = jnp.pad(w2b, ((0, 0), (0, Dp - D_out)))
        b2f = jnp.pad(b2f, (0, Dp - D_out))
    return {
        "w1": w1b,
        "gamma": gamma.astype(jnp.float32).reshape(1, H),
        "beta": beta.astype(jnp.float32).reshape(1, H),
        "w2": w2b,
        "b2": b2f.reshape(1, Dp),
    }


def mlp_forward(x_flat, params, d_out, *, tk=None, th=None, n_dout_splits=1):
    """x_flat: (B, D_in). params: prepare_params(...) output. Returns (B, d_out) f32."""
    B, D_in = x_flat.shape
    H = params["w1"].shape[1]
    Dp = params["w2"].shape[1]

    # Optional megacore split over D_out (leading "parallel" axis). Useful on
    # v7x (2 TCs/chip); keep =1 on single-TC chips since matmul-1 is recomputed
    # per chunk.
    n_d = n_dout_splits
    if n_d < 1 or Dp % n_d != 0 or (Dp // n_d) % 128 != 0:
        n_d = 1
    Dpc = Dp // n_d

    # Sublane-friendly batch: pad to a multiple of 16 (bf16 packing). Padded
    # rows are zero and BN divides by the true batch size, so stats stay exact.
    B_pad = _round_up(max(B, 16), 16)

    cap = _vmem_capacity_bytes()
    budget = int(cap * 0.65)              # leave headroom for Mosaic scratch

    if tk is not None or th is not None:
        tk = D_in if tk is None else tk
        th = H if th is None else th
        assert D_in % tk == 0 and (tk == D_in or tk % 128 == 0)
        assert H % th == 0 and (th == H or th % 128 == 0)
        x_resident = _footprint_bytes(B_pad, D_in, tk, th, Dpc, True, 3) <= budget
    else:
        choice = None
        for th_c in _tile_candidates(H):
            for tk_c in _tile_candidates(D_in):
                for x_res in (True, False):
                    if _footprint_bytes(B_pad, D_in, tk_c, th_c, Dpc,
                                        x_res, 3) <= budget:
                        choice = (th_c, tk_c, x_res)
                        break
                if choice:
                    break
            if choice:
                break
        if choice is None:                # nothing fits -> smallest tiles, streamed x
            choice = (_tile_candidates(H)[-1], _tile_candidates(D_in)[-1], False)
        th, tk, x_resident = choice

    n_h = H // th
    n_k = D_in // tk
    n_steps = n_d * n_h * n_k
    w1_bufs = 3 if n_steps >= 3 else None      # deepen streamed-weight buffering

    fp = _footprint_bytes(B_pad, D_in, tk, th, Dpc, x_resident,
                          w1_bufs if w1_bufs else 2)
    vmem_limit = int(min(max(2 * fp, 32 * 1024 * 1024), int(cap * 0.85)))

    # Per-call activation prep only (weights were prepared once).
    xb = x_flat.astype(jnp.bfloat16)
    if B_pad != B:
        xb = jnp.pad(xb, ((0, B_pad - B), (0, 0)))

    def _spec(shape, imap, bufs=None):
        if bufs is None:
            return pl.BlockSpec(shape, imap)
        return pl.BlockSpec(shape, imap, pipeline_mode=pl.Buffered(bufs))

    if x_resident:
        # Constant block index: x is DMA'd from HBM exactly once and stays in VMEM.
        x_spec = _spec((B_pad, D_in), lambda d, h, k: (0, 0))
    else:
        x_spec = _spec((B_pad, tk), lambda d, h, k: (0, k), w1_bufs)

    kernel = functools.partial(_mlp_kernel, inv_b=1.0 / B, b_valid=B,
                               tk=tk, x_resident=x_resident)

    out_padded = pl.pallas_call(
        kernel,
        out_shape=jax.ShapeDtypeStruct((B_pad, Dp), jnp.float32),
        grid_spec=pltpu.PrefetchScalarGridSpec(
            num_scalar_prefetch=0,
            grid=(n_d, n_h, n_k),
            in_specs=[
                x_spec,                                            # x
                _spec((tk, th), lambda d, h, k: (k, h), w1_bufs),  # w1
                _spec((1, th), lambda d, h, k: (0, h)),            # gamma
                _spec((1, th), lambda d, h, k: (0, h)),            # beta
                _spec((th, Dpc), lambda d, h, k: (h, d)),          # w2
                _spec((1, Dpc), lambda d, h, k: (0, d)),           # b2
            ],
            # Output block is resident across (h, k); bias-seeded + accumulated
            # in place, so no extra output scratch is needed.
            out_specs=pl.BlockSpec((B_pad, Dpc), lambda d, h, k: (0, d)),
            scratch_shapes=[
                pltpu.VMEM((B_pad, th), jnp.float32),   # matmul-1 / BN accumulator
            ],
        ),
        compiler_params=pltpu.CompilerParams(
            # d chunks are independent (megacore-parallel); h and k feed
            # resident VMEM accumulators -> serial ("arbitrary").
            dimension_semantics=("parallel", "arbitrary", "arbitrary"),
            vmem_limit_bytes=vmem_limit,
        ),
    )(xb, params["w1"], params["gamma"], params["beta"],
      params["w2"], params["b2"])

    return out_padded[:B, :d_out]


def init_params(key, input_dim, hidden_size, output_dim):
    """Deterministic parameter init (PyTorch-style uniform bounds), stored in f32."""
    k1, k2, k3 = jax.random.split(key, 3)
    bound1 = 1.0 / (input_dim ** 0.5)
    w1 = jax.random.uniform(k1, (input_dim, hidden_size), jnp.float32, -bound1, bound1)
    gamma = jnp.ones((hidden_size,), jnp.float32)    # BatchNorm1d weight init
    beta = jnp.zeros((hidden_size,), jnp.float32)    # BatchNorm1d bias init
    bound2 = 1.0 / (hidden_size ** 0.5)
    w2 = jax.random.uniform(k2, (hidden_size, output_dim), jnp.float32, -bound2, bound2)
    b2 = jax.random.uniform(k3, (output_dim,), jnp.float32, -bound2, bound2)
    return w1, gamma, beta, w2, b2


if __name__ == "__main__":
    # Small shapes consistent with the module: x is NCHW; Flatten -> (B, C*H*W).
    B, C, Himg, Wimg = 8, 4, 8, 8
    input_dim = C * Himg * Wimg          # 256
    hidden_size = 256
    output_dim = 192                     # padded to 256 lanes inside the kernel

    key = jax.random.PRNGKey(0)
    kx, kp = jax.random.split(key)
    x_nchw = jax.random.normal(kx, (B, C, Himg, Wimg), jnp.float32)
    x_flat = x_nchw.reshape(B, -1)       # glue: Flatten()

    w1, gamma, beta, w2, b2 = init_params(kp, input_dim, hidden_size, output_dim)
    params = prepare_params(w1, gamma, beta, w2, b2)   # one-time weight prep

    # (a) auto tiling: collapses to a single grid step at these shapes (jitted).
    fwd = jax.jit(lambda xf: mlp_forward(xf, params, output_dim))
    out = jax.block_until_ready(fwd(x_flat))

    # (b) forced small tiles + D_out split: exercises the multi-step grid, the
    #     in-kernel x slicing, deep-buffered w1 stream, and the parallel d axis.
    out_tiled = jax.block_until_ready(
        mlp_forward(x_flat, params, output_dim, tk=128, th=128, n_dout_splits=2))

    # --- tight reference: same bf16 operand quantization as the kernel ---
    xq = x_flat.astype(jnp.bfloat16).astype(jnp.float32)
    w1q = w1.astype(jnp.bfloat16).astype(jnp.float32)
    w2q = w2.astype(jnp.bfloat16).astype(jnp.float32)
    h = xq @ w1q
    mu = h.mean(0, keepdims=True)
    var = ((h - mu) ** 2).mean(0, keepdims=True)
    a = jnp.maximum((h - mu) * jax.lax.rsqrt(var + BN_EPS) * gamma + beta, 0.0)
    ref_bf16 = a.astype(jnp.bfloat16).astype(jnp.float32) @ w2q + b2

    # --- module-fidelity reference: full f32, PyTorch training-mode BatchNorm ---
    h32 = x_flat @ w1
    mu32 = h32.mean(0, keepdims=True)
    v32 = ((h32 - mu32) ** 2).mean(0, keepdims=True)
    ref_f32 = jnp.maximum((h32 - mu32) / jnp.sqrt(v32 + BN_EPS) * gamma + beta,
                          0.0) @ w2 + b2

    for o in (out, out_tiled):
        assert o.shape == (B, output_dim)
        assert jnp.allclose(o, ref_bf16, atol=5e-3, rtol=5e-3), \
            "mismatch vs bf16-matched reference"
        assert jnp.allclose(o, ref_f32, atol=1e-1, rtol=1e-1), \
            "mismatch vs f32 module reference"

    print("KERNEL_OK")
</pallas_src>

<mosaic_0001>
module attributes {stable_mosaic.version = 11 : i64} {
  func.func @_mlp_kernel(%arg0: i32, %arg1: i32, %arg2: i32, %arg3: memref<16x256xbf16, #tpu.memory_space<vmem>>, %arg4: memref<256x256xbf16, #tpu.memory_space<vmem>>, %arg5: memref<1x256xf32, #tpu.memory_space<vmem>>, %arg6: memref<1x256xf32, #tpu.memory_space<vmem>>, %arg7: memref<256x256xbf16, #tpu.memory_space<vmem>>, %arg8: memref<1x256xf32, #tpu.memory_space<vmem>>, %arg9: memref<16x256xf32, #tpu.memory_space<vmem>>, %arg10: memref<16x256xf32, #tpu.memory_space<vmem>>) attributes {dimension_semantics = [#tpu.dimension_semantics<parallel>, #tpu.dimension_semantics<arbitrary>, #tpu.dimension_semantics<arbitrary>], iteration_bounds = array<i64: 1, 1, 1>, scalar_prefetch = 0 : i64, scratch_operands = 1 : i64, tpu.core_type = #tpu.core_type<tc>, window_params = [{pipeline_mode = #tpu.pipeline_mode<synchronous>, transform_indices = @transform_0, window_bounds = array<i64: 16, 256>}, {transform_indices = @transform_1, window_bounds = array<i64: 256, 256>}, {transform_indices = @transform_2, window_bounds = array<i64: 1, 256>}, {transform_indices = @transform_3, window_bounds = array<i64: 1, 256>}, {transform_indices = @transform_4, window_bounds = array<i64: 256, 256>}, {transform_indices = @transform_5, window_bounds = array<i64: 1, 256>}, {transform_indices = @transform_6, window_bounds = array<i64: 16, 256>}]} {
    %c0_i32 = arith.constant 0 : i32
    %0 = arith.cmpi eq, %arg1, %c0_i32 : i32
    %c0_i32_0 = arith.constant 0 : i32
    %1 = arith.cmpi eq, %arg2, %c0_i32_0 : i32
    %2 = arith.andi %0, %1 : i1
    %3 = arith.extui %2 : i1 to i32
    %c0_i32_1 = arith.constant 0 : i32
    %4 = arith.cmpi ne, %3, %c0_i32_1 : i32
    scf.if %4 {
      %cst_13 = arith.constant 0.000000e+00 : f32
      %17 = vector.broadcast %cst_13 : f32 to vector<16x256xf32>
      %c0_14 = arith.constant 0 : index
      %c0_15 = arith.constant 0 : index
      %18 = vector.load %arg8[%c0_14, %c0_15] : memref<1x256xf32, #tpu.memory_space<vmem>>, vector<1x256xf32>
      %19 = vector.broadcast %18 : vector<1x256xf32> to vector<16x256xf32>
      %20 = arith.addf %17, %19 : vector<16x256xf32>
      %c0_16 = arith.constant 0 : index
      %c0_17 = arith.constant 0 : index
      %21 = vector.load %arg9[%c0_16, %c0_17] : memref<16x256xf32, #tpu.memory_space<vmem>>, vector<16x256xf32>
      tpu.vector_store %arg9[%c0_16, %c0_17], %20 {strides = array<i32>} : memref<16x256xf32, #tpu.memory_space<vmem>>, vector<16x256xf32>,
    } else {
    }
    %c0_i32_2 = arith.constant 0 : i32
    %5 = arith.cmpi eq, %arg2, %c0_i32_2 : i32
    %6 = arith.extui %5 : i1 to i32
    %c0_i32_3 = arith.constant 0 : i32
    %7 = arith.cmpi ne, %6, %c0_i32_3 : i32
    scf.if %7 {
      %cst_13 = arith.constant 0.000000e+00 : f32
      %17 = vector.broadcast %cst_13 : f32 to vector<16x256xf32>
      %c0_14 = arith.constant 0 : index
      %c0_15 = arith.constant 0 : index
      %18 = vector.load %arg10[%c0_14, %c0_15] : memref<16x256xf32, #tpu.memory_space<vmem>>, vector<16x256xf32>
      tpu.vector_store %arg10[%c0_14, %c0_15], %17 {strides = array<i32>} : memref<16x256xf32, #tpu.memory_space<vmem>>, vector<16x256xf32>,
    } else {
    }
    %c0 = arith.constant 0 : index
    %c0_4 = arith.constant 0 : index
    %8 = vector.load %arg3[%c0, %c0_4] : memref<16x256xbf16, #tpu.memory_space<vmem>>, vector<16x256xbf16>
    %c0_5 = arith.constant 0 : index
    %c0_6 = arith.constant 0 : index
    %9 = vector.load %arg10[%c0_5, %c0_6] : memref<16x256xf32, #tpu.memory_space<vmem>>, vector<16x256xf32>
    %c0_7 = arith.constant 0 : index
    %c0_8 = arith.constant 0 : index
    %10 = vector.load %arg4[%c0_7, %c0_8] : memref<256x256xbf16, #tpu.memory_space<vmem>>, vector<256x256xbf16>
    %cst = arith.constant dense<0.000000e+00> : vector<16x256xf32>
    %11 = tpu.matmul %8, %10, %cst {dimension_numbers = #tpu.dot_dimension_numbers<[1], [0], [0], [1], [0, 0, 1, 1], [], []>} : vector<16x256xbf16>, vector<256x256xbf16>, vector<16x256xf32> -> vector<16x256xf32>
    %12 = arith.addf %9, %11 : vector<16x256xf32>
    %c0_9 = arith.constant 0 : index
    %c0_10 = arith.constant 0 : index
    %13 = vector.load %arg10[%c0_9, %c0_10] : memref<16x256xf32, #tpu.memory_space<vmem>>, vector<16x256xf32>
    tpu.vector_store %arg10[%c0_9, %c0_10], %12 {strides = array<i32>} : memref<16x256xf32, #tpu.memory_space<vmem>>, vector<16x256xf32>,
    %c0_i32_11 = arith.constant 0 : i32
    %14 = arith.cmpi eq, %arg2, %c0_i32_11 : i32
    %15 = arith.extui %14 : i1 to i32
    %c0_i32_12 = arith.constant 0 : i32
    %16 = arith.cmpi ne, %15, %c0_i32_12 : i32
    scf.if %16 {
      %c0_13 = arith.constant 0 : index
      %c0_14 = arith.constant 0 : index
      %17 = vector.load %arg10[%c0_13, %c0_14] : memref<16x256xf32, #tpu.memory_space<vmem>>, vector<16x256xf32>
      %cst_15 = arith.constant dense<0.000000e+00> : vector<256xf32>
      %18 = vector.multi_reduction <add>, %17, %cst_15 [0] : vector<16x256xf32> to vector<256xf32>
      %19 = vector.shape_cast %18 : vector<256xf32> to vector<1x256xf32>
      %cst_16 = arith.constant 1.250000e-01 : f32
      %20 = vector.broadcast %cst_16 : f32 to vector<1x256xf32>
      %21 = arith.mulf %19, %20 : vector<1x256xf32>
      %22 = vector.broadcast %21 : vector<1x256xf32> to vector<16x256xf32>
      %23 = arith.subf %17, %22 : vector<16x256xf32>
      %24 = tpu.iota {dimensions = array<i32: 0>} : vector<16x256xi32>
      %c8_i32 = arith.constant 8 : i32
      %25 = vector.broadcast %c8_i32 : i32 to vector<16x256xi32>
      %26 = arith.cmpi slt, %24, %25 : vector<16x256xi32>
      %cst_17 = arith.constant 0.000000e+00 : f32
      %27 = vector.broadcast %cst_17 : f32 to vector<16x256xf32>
      %28 = arith.select %26, %23, %27 : vector<16x256xi1>, vector<16x256xf32>
      %29 = arith.mulf %28, %28 : vector<16x256xf32>
      %cst_18 = arith.constant dense<0.000000e+00> : vector<256xf32>
      %30 = vector.multi_reduction <add>, %29, %cst_18 [0] : vector<16x256xf32> to vector<256xf32>
      %31 = vector.shape_cast %30 : vector<256xf32> to vector<1x256xf32>
      %cst_19 = arith.constant 1.250000e-01 : f32
      %32 = vector.broadcast %cst_19 : f32 to vector<1x256xf32>
      %33 = arith.mulf %31, %32 : vector<1x256xf32>
      %c0_20 = arith.constant 0 : index
      %c0_21 = arith.constant 0 : index
      %34 = vector.load %arg5[%c0_20, %c0_21] : memref<1x256xf32, #tpu.memory_space<vmem>>, vector<1x256xf32>
      %cst_22 = arith.constant 9.99999974E-6 : f32
      %35 = vector.broadcast %cst_22 : f32 to vector<1x256xf32>
      %36 = arith.addf %33, %35 : vector<1x256xf32>
      %37 = math.rsqrt %36 : vector<1x256xf32>
      %38 = arith.mulf %34, %37 : vector<1x256xf32>
      %c0_23 = arith.constant 0 : index
      %c0_24 = arith.constant 0 : index
      %39 = vector.load %arg6[%c0_23, %c0_24] : memref<1x256xf32, #tpu.memory_space<vmem>>, vector<1x256xf32>
      %40 = arith.mulf %21, %38 : vector<1x256xf32>
      %41 = arith.subf %39, %40 : vector<1x256xf32>
      %42 = vector.broadcast %38 : vector<1x256xf32> to vector<16x256xf32>
      %43 = arith.mulf %17, %42 : vector<16x256xf32>
      %44 = vector.broadcast %41 : vector<1x256xf32> to vector<16x256xf32>
      %45 = arith.addf %43, %44 : vector<16x256xf32>
      %cst_25 = arith.constant 0.000000e+00 : f32
      %46 = vector.broadcast %cst_25 : f32 to vector<16x256xf32>
      %47 = arith.maximumf %45, %46 : vector<16x256xf32>
      %c0_26 = arith.constant 0 : index
      %c0_27 = arith.constant 0 : index
      %48 = vector.load %arg9[%c0_26, %c0_27] : memref<16x256xf32, #tpu.memory_space<vmem>>, vector<16x256xf32>
      %49 = arith.truncf %47 : vector<16x256xf32> to vector<16x256xbf16>
      %c0_28 = arith.constant 0 : index
      %c0_29 = arith.constant 0 : index
      %50 = vector.load %arg7[%c0_28, %c0_29] : memref<256x256xbf16, #tpu.memory_space<vmem>>, vector<256x256xbf16>
      %cst_30 = arith.constant dense<0.000000e+00> : vector<16x256xf32>
      %51 = tpu.matmul %49, %50, %cst_30 {dimension_numbers = #tpu.dot_dimension_numbers<[1], [0], [0], [1], [0, 0, 1, 1], [], []>} : vector<16x256xbf16>, vector<256x256xbf16>, vector<16x256xf32> -> vector<16x256xf32>
      %52 = arith.addf %48, %51 : vector<16x256xf32>
      %c0_31 = arith.constant 0 : index
      %c0_32 = arith.constant 0 : index
      %53 = vector.load %arg9[%c0_31, %c0_32] : memref<16x256xf32, #tpu.memory_space<vmem>>, vector<16x256xf32>
      tpu.vector_store %arg9[%c0_31, %c0_32], %52 {strides = array<i32>} : memref<16x256xf32, #tpu.memory_space<vmem>>, vector<16x256xf32>,
    } else {
    }
    return
  }
  func.func @transform_0(%arg0: i32, %arg1: i32, %arg2: i32) -> (i32, i32) {
    %c0_i32 = arith.constant 0 : i32
    %c0_i32_0 = arith.constant 0 : i32
    %c0_i32_1 = arith.constant 0 : i32
    return %c0_i32, %c0_i32_0 : i32, i32
  }
  func.func @transform_1(%arg0: i32, %arg1: i32, %arg2: i32) -> (i32, i32) {
    %c0_i32 = arith.constant 0 : i32
    return %arg2, %arg1 : i32, i32
  }
  func.func @transform_2(%arg0: i32, %arg1: i32, %arg2: i32) -> (i32, i32) {
    %c0_i32 = arith.constant 0 : i32
    %c0_i32_0 = arith.constant 0 : i32
    return %c0_i32, %arg1 : i32, i32
  }
  func.func @transform_3(%arg0: i32, %arg1: i32, %arg2: i32) -> (i32, i32) {
    %c0_i32 = arith.constant 0 : i32
    %c0_i32_0 = arith.constant 0 : i32
    return %c0_i32, %arg1 : i32, i32
  }
  func.func @transform_4(%arg0: i32, %arg1: i32, %arg2: i32) -> (i32, i32) {
    %c0_i32 = arith.constant 0 : i32
    return %arg1, %arg0 : i32, i32
  }
  func.func @transform_5(%arg0: i32, %arg1: i32, %arg2: i32) -> (i32, i32) {
    %c0_i32 = arith.constant 0 : i32
    %c0_i32_0 = arith.constant 0 : i32
    return %c0_i32, %arg0 : i32, i32
  }
  func.func @transform_6(%arg0: i32, %arg1: i32, %arg2: i32) -> (i32, i32) {
    %c0_i32 = arith.constant 0 : i32
    %c0_i32_0 = arith.constant 0 : i32
    return %c0_i32, %arg0 : i32, i32
  }
}

</mosaic_0001>

<llo_original>
// kernel: _lambda_.1
$region0: #{_lambda_.1}
  #allocation0 [shape = 'u32[]', space=smem, size = 0x4, offset = 0x4, fixed_abs, tag = 'smem constant byte address 0x4 - core index']
  #allocation1 [shape = 'u32[72,128]{1,0:T(1,128)}', space=vmem, size = 0x9000, scoped, tag = 'internal scratch']
  #allocation2 [shape = 'f32[16,256]{1,0:T(8,128)}', space=vmem, size = 0x4000, scoped, tag = 'scratch operand']
  %s0 = inlined_call_operand.vmem [shape: bf16[16,256], index: 0, kind: input, shape index: {}]
  %s1 = inlined_call_operand.hbm [shape: bf16[256,256], index: 1, kind: input, shape index: {}]
  %s2 = inlined_call_operand.vmem [shape: f32[1,256], index: 2, kind: input, shape index: {}]
  %s3 = inlined_call_operand.vmem [shape: f32[1,256], index: 3, kind: input, shape index: {}]
  %s4 = inlined_call_operand.hbm [shape: bf16[256,256], index: 4, kind: input, shape index: {}]
  %s5 = inlined_call_operand.vmem [shape: f32[1,256], index: 5, kind: input, shape index: {}]
  %s6 = inlined_call_operand.vmem [shape: f32[16,256], index: 6, kind: output, shape index: {}]
  %s7 = sld [smem:[#allocation0]]
  $region54: #{_lambda_.1} parent=0
    _
  %s9 = ssub.s32 1, %s7
  %s10 = scalar_select 0, %s9, %s7
  $region1: #{_lambda_.1} parent=0
    #allocation3 [shape = 'u8[131072]{0}', space=vmem, size = 0x20000, scoped, tag = 'input window, operand 1, single buffered']
    #allocation4 [shape = 's32[1]{0}', space=sflag, size = 0x4, scoped, tag = 'scoped memory for _lambda_.1']
    #allocation5 [shape = 'u8[131072]{0}', space=vmem, size = 0x20000, scoped, tag = 'input window, operand 4, single buffered']
    #allocation6 [shape = 's32[1]{0}', space=sflag, size = 0x4, scoped, tag = 'scoped memory for _lambda_.1']
    %11 = vsyncpa [#allocation4], 0
    %12 = vsyncpa [#allocation6], 0
    // Predicated region
    $region2: #{_lambda_.1} parent=1 // pred_check
      _
    $region3: #{_lambda_.1} parent=1 // pred_check_branch
      %14 = sbr.rel (0) target = $region5
    $region4: #{_lambda_.1} parent=1 // pred_region
      _
    $region5: #{_lambda_.1} parent=1 // pred_fallthru
      _
    // Predicated region
    $region6: #{_lambda_.1} parent=1 // pred_check
      _
    $region7: #{_lambda_.1} parent=1 // pred_check_branch
      %16 = sbr.rel (0) target = $region9
    $region8: #{_lambda_.1} parent=1 // pred_region
      %18 = vsyncadd [#allocation4], 0
      %s19 = sshll.u32 %s1, 4
      %s20 = int_to_ptr.hbm [resolvable:$true] %s19
      %s21 = sshll.u32 [#allocation3], 4
      %s22 = int_to_ptr.vmem [resolvable:$true] %s21
      %27 = dma.hbm_to_vmem [thread:$0]  %s20, 4096, %s22, [#allocation4], 128, 128, 8
    $region9: #{_lambda_.1} parent=1 // pred_fallthru
      _
    // Predicated region
    $region10: #{_lambda_.1} parent=1 // pred_check
      _
    $region11: #{_lambda_.1} parent=1 // pred_check_branch
      %29 = sbr.rel (0) target = $region13
    $region12: #{_lambda_.1} parent=1 // pred_region
      _
    $region13: #{_lambda_.1} parent=1 // pred_fallthru
      _
    // Predicated region
    $region14: #{_lambda_.1} parent=1 // pred_check
      _
    $region15: #{_lambda_.1} parent=1 // pred_check_branch
      %31 = sbr.rel (0) target = $region17
    $region16: #{_lambda_.1} parent=1 // pred_region
      _
    $region17: #{_lambda_.1} parent=1 // pred_fallthru
      _
    // Predicated region
    $region18: #{_lambda_.1} parent=1 // pred_check
      _
    $region19: #{_lambda_.1} parent=1 // pred_check_branch
      %33 = sbr.rel (0) target = $region21
    $region20: #{_lambda_.1} parent=1 // pred_region
      %35 = vsyncadd [#allocation6], 0
      %s36 = sshll.u32 %s4, 4
      %s37 = int_to_ptr.hbm [resolvable:$true] %s36
      %s38 = sshll.u32 [#allocation5], 4
      %s39 = int_to_ptr.vmem [resolvable:$true] %s38
      %44 = dma.hbm_to_vmem [thread:$0]  %s37, 4096, %s39, [#allocation6], 128, 128, 8
    $region21: #{_lambda_.1} parent=1 // pred_fallthru
      _
    // Predicated region
    $region22: #{_lambda_.1} parent=1 // pred_check
      _
    $region23: #{_lambda_.1} parent=1 // pred_check_branch
      %46 = sbr.rel (0) target = $region25
    $region24: #{_lambda_.1} parent=1 // pred_region
      _
    $region25: #{_lambda_.1} parent=1 // pred_fallthru
      _
    // Predicated region
    $region26: #{_lambda_.1} parent=1 // pred_check
      _
    $region27: #{_lambda_.1} parent=1 // pred_check_branch
      %48 = sbr.rel (0) target = $region29
    $region28: #{_lambda_.1} parent=1 // pred_region
      %50 = dma.done [#allocation4], 4096
    $region29: #{_lambda_.1} parent=1 // pred_fallthru
      _
    // Predicated region
    $region30: #{_lambda_.1} parent=1 // pred_check
      _
    $region31: #{_lambda_.1} parent=1 // pred_check_branch
      %52 = sbr.rel (0) target = $region33
    $region32: #{_lambda_.1} parent=1 // pred_region
      %54 = dma.done [#allocation6], 4096
    $region33: #{_lambda_.1} parent=1 // pred_fallthru
      _
    %p55 = scmp.eq.s32.totalorder 0, 0
    %p56 = scmp.eq.s32.totalorder 0, 0
    %p57 = pnand %p55, %p56
    %p58 = pneg %p57
    // Predicated region
    $region34: #{_lambda_.1} parent=1 // pred_check
      _
    $region35: #{_lambda_.1} parent=1 // pred_check_branch
      %60 = sbr.rel (%p57) target = $region37
    $region36: #{_lambda_.1} parent=1 // pred_region
      %v61 = vld [vmem:[%s5] sm:$0x3]
      %v63 = vperm.slane %v61, 0
      %v64 = vperm.slane %v61, 1
      %v67 = vadd.f32 %v63, 0.0
      %v68 = vadd.f32 %v64, 0.0
      %69 = vst [vmem:[%s6] sm:$0xff] %v67
      %70 = vst [vmem:[%s6 + $0x8] sm:$0xff] %v68
      %71 = vst [vmem:[%s6 + $0x10] sm:$0xff] %v67
      %72 = vst [vmem:[%s6 + $0x18] sm:$0xff] %v68
    $region37: #{_lambda_.1} parent=1 // pred_fallthru
      _
    // Predicated region
    $region38: #{_lambda_.1} parent=1 // pred_check
      %p73 = pneg %p56
    $region39: #{_lambda_.1} parent=1 // pred_check_branch
      %75 = sbr.rel (%p73) target = $region41
    $region40: #{_lambda_.1} parent=1 // pred_region
      %76 = vst [vmem:[#allocation2] sm:$0xff] 0.0
      %77 = vst [vmem:[#allocation2 + $0x8] sm:$0xff] 0.0
      %78 = vst [vmem:[#allocation2 + $0x10] sm:$0xff] 0.0
      %79 = vst [vmem:[#allocation2 + $0x18] sm:$0xff] 0.0
    $region41: #{_lambda_.1} parent=1 // pred_fallthru
      _
    %v80 = vld [vmem:[%s0] sm:$0xff]
    %v81 = vld [vmem:[%s0 + $0x8] sm:$0xff]
    %v82 = vld [vmem:[#allocation2] sm:$0xff]
    %v83 = vld [vmem:[#allocation2 + $0x8] sm:$0xff]
    %v84 = vld [vmem:[#allocation2 + $0x10] sm:$0xff]
    %v85 = vld [vmem:[#allocation2 + $0x18] sm:$0xff]
    %v86 = vld [vmem:[#allocation3] sm:$0xff]
    %v87 = vld [vmem:[#allocation3 + $0x8] sm:$0xff]
    %v88 = vld [vmem:[#allocation3 + $0x10] sm:$0xff]
    %v89 = vld [vmem:[#allocation3 + $0x18] sm:$0xff]
    %v90 = vld [vmem:[#allocation3 + $0x20] sm:$0xff]
    %v91 = vld [vmem:[#allocation3 + $0x28] sm:$0xff]
    %v92 = vld [vmem:[#allocation3 + $0x30] sm:$0xff]
    %v93 = vld [vmem:[#allocation3 + $0x38] sm:$0xff]
    %v94 = vld [vmem:[#allocation3 + $0x40] sm:$0xff]
    %v95 = vld [vmem:[#allocation3 + $0x48] sm:$0xff]
    %v96 = vld [vmem:[#allocation3 + $0x50] sm:$0xff]
    %v97 = vld [vmem:[#allocation3 + $0x58] sm:$0xff]
    %v98 = vld [vmem:[#allocation3 + $0x60] sm:$0xff]
    %v99 = vld [vmem:[#allocation3 + $0x68] sm:$0xff]
    %v100 = vld [vmem:[#allocation3 + $0x70] sm:$0xff]
    %v101 = vld [vmem:[#allocation3 + $0x78] sm:$0xff]
    %v102 = vld [vmem:[#allocation3 + $0x80] sm:$0xff]
    %v103 = vld [vmem:[#allocation3 + $0x88] sm:$0xff]
    %v104 = vld [vmem:[#allocation3 + $0x90] sm:$0xff]
    %v105 = vld [vmem:[#allocation3 + $0x98] sm:$0xff]
    %v106 = vld [vmem:[#allocation3 + $0xa0] sm:$0xff]
    %v107 = vld [vmem:[#allocation3 + $0xa8] sm:$0xff]
    %v108 = vld [vmem:[#allocation3 + $0xb0] sm:$0xff]
    %v109 = vld [vmem:[#allocation3 + $0xb8] sm:$0xff]
    %v110 = vld [vmem:[#allocation3 + $0xc0] sm:$0xff]
    %v111 = vld [vmem:[#allocation3 + $0xc8] sm:$0xff]
    %v112 = vld [vmem:[#allocation3 + $0xd0] sm:$0xff]
    %v113 = vld [vmem:[#allocation3 + $0xd8] sm:$0xff]
    %v114 = vld [vmem:[#allocation3 + $0xe0] sm:$0xff]
    %v115 = vld [vmem:[#allocation3 + $0xe8] sm:$0xff]
    %v116 = vld [vmem:[#allocation3 + $0xf0] sm:$0xff]
    %v117 = vld [vmem:[#allocation3 + $0xf8] sm:$0xff]
    %v120 = vunpack.c.l.b16 %v80
    %v121 = vunpack.c.h.b16 %v80
    %v122 = vunpack.c.l.b16 %v81
    %v123 = vunpack.c.h.b16 %v81
    %v124 = vpack.c.b16 %v122, %v120
    %v125 = vpack.c.b16 %v123, %v121
    %v160 = vunpack.c.l.b16 %v86
    %v161 = vunpack.c.h.b16 %v86
    %v162 = vunpack.c.l.b16 %v87
    %v163 = vunpack.c.h.b16 %v87
    %v164 = vunpack.c.l.b16 %v88
    %v165 = vunpack.c.h.b16 %v88
    %v166 = vunpack.c.l.b16 %v89
    %v167 = vunpack.c.h.b16 %v89
    %v168 = vunpack.c.l.b16 %v90
    %v169 = vunpack.c.h.b16 %v90
    %v170 = vunpack.c.l.b16 %v91
    %v171 = vunpack.c.h.b16 %v91
    %v172 = vunpack.c.l.b16 %v92
    %v173 = vunpack.c.h.b16 %v92
    %v174 = vunpack.c.l.b16 %v93
    %v175 = vunpack.c.h.b16 %v93
    %v176 = vunpack.c.l.b16 %v94
    %v177 = vunpack.c.h.b16 %v94
    %v178 = vunpack.c.l.b16 %v95
    %v179 = vunpack.c.h.b16 %v95
    %v180 = vunpack.c.l.b16 %v96
    %v181 = vunpack.c.h.b16 %v96
    %v182 = vunpack.c.l.b16 %v97
    %v183 = vunpack.c.h.b16 %v97
    %v184 = vunpack.c.l.b16 %v98
    %v185 = vunpack.c.h.b16 %v98
    %v186 = vunpack.c.l.b16 %v99
    %v187 = vunpack.c.h.b16 %v99
    %v188 = vunpack.c.l.b16 %v100
    %v189 = vunpack.c.h.b16 %v100
    %v190 = vunpack.c.l.b16 %v101
    %v191 = vunpack.c.h.b16 %v101
    %v192 = vunpack.c.l.b16 %v102
    %v193 = vunpack.c.h.b16 %v102
    %v194 = vunpack.c.l.b16 %v103
    %v195 = vunpack.c.h.b16 %v103
    %v196 = vunpack.c.l.b16 %v104
    %v197 = vunpack.c.h.b16 %v104
    %v198 = vunpack.c.l.b16 %v105
    %v199 = vunpack.c.h.b16 %v105
    %v200 = vunpack.c.l.b16 %v106
    %v201 = vunpack.c.h.b16 %v106
    %v202 = vunpack.c.l.b16 %v107
    %v203 = vunpack.c.h.b16 %v107
    %v204 = vunpack.c.l.b16 %v108
    %v205 = vunpack.c.h.b16 %v108
    %v206 = vunpack.c.l.b16 %v109
    %v207 = vunpack.c.h.b16 %v109
    %v208 = vunpack.c.l.b16 %v110
    %v209 = vunpack.c.h.b16 %v110
    %v210 = vunpack.c.l.b16 %v111
    %v211 = vunpack.c.h.b16 %v111
    %v212 = vunpack.c.l.b16 %v112
    %v213 = vunpack.c.h.b16 %v112
    %v214 = vunpack.c.l.b16 %v113
    %v215 = vunpack.c.h.b16 %v113
    %v216 = vunpack.c.l.b16 %v114
    %v217 = vunpack.c.h.b16 %v114
    %v218 = vunpack.c.l.b16 %v115
    %v219 = vunpack.c.h.b16 %v115
    %v220 = vunpack.c.l.b16 %v116
    %v221 = vunpack.c.h.b16 %v116
    %v222 = vunpack.c.l.b16 %v117
    %v223 = vunpack.c.h.b16 %v117
    %v224 = vpack.c.b16 %v162, %v160
    %v225 = vpack.c.b16 %v163, %v161
    %v226 = vpack.c.b16 %v166, %v164
    %v227 = vpack.c.b16 %v167, %v165
    %v228 = vpack.c.b16 %v170, %v168
    %v229 = vpack.c.b16 %v171, %v169
    %v230 = vpack.c.b16 %v174, %v172
    %v231 = vpack.c.b16 %v175, %v173
    %v232 = vpack.c.b16 %v178, %v176
    %v233 = vpack.c.b16 %v179, %v177
    %v234 = vpack.c.b16 %v182, %v180
    %v235 = vpack.c.b16 %v183, %v181
    %v236 = vpack.c.b16 %v186, %v184
    %v237 = vpack.c.b16 %v187, %v185
    %v238 = vpack.c.b16 %v190, %v188
    %v239 = vpack.c.b16 %v191, %v189
    %v240 = vpack.c.b16 %v194, %v192
    %v241 = vpack.c.b16 %v195, %v193
    %v242 = vpack.c.b16 %v198, %v196
    %v243 = vpack.c.b16 %v199, %v197
    %v244 = vpack.c.b16 %v202, %v200
    %v245 = vpack.c.b16 %v203, %v201
    %v246 = vpack.c.b16 %v206, %v204
    %v247 = vpack.c.b16 %v207, %v205
    %v248 = vpack.c.b16 %v210, %v208
    %v249 = vpack.c.b16 %v211, %v209
    %v250 = vpack.c.b16 %v214, %v212
    %v251 = vpack.c.b16 %v215, %v213
    %v252 = vpack.c.b16 %v218, %v216
    %v253 = vpack.c.b16 %v219, %v217
    %v254 = vpack.c.b16 %v222, %v220
    %v255 = vpack.c.b16 %v223, %v221
    %288 = vmatpush.bf16.msra.mxu0 %v238
    %289 = vmatpush.bf16.msra.mxu0 %v236
    %290 = vmatpush.bf16.msra.mxu0 %v234
    %291 = vmatpush.bf16.msra.mxu0 %v232
    %292 = vmatpush.bf16.msra.mxu0 %v230
    %293 = vmatpush.bf16.msra.mxu0 %v228
    %294 = vmatpush.bf16.msra.mxu0 %v226
    %295 = vmatpush.bf16.msra.mxu0 %v224
    %296 = vmatmul.bf16.gmra.mxu0 %v124
    %v297 = vpop.f32.mrf.mxu0
    %v298 = vadd.f32 0.0, %v297
    %v299 = vpop.f32.mrf.mxu0
    %v300 = vadd.f32 0.0, %v299
    %301 = vdwg.mxu0
    %302 = vmatpush.bf16.msra.mxu0 %v254
    %303 = vmatpush.bf16.msra.mxu0 %v252
    %304 = vmatpush.bf16.msra.mxu0 %v250
    %305 = vmatpush.bf16.msra.mxu0 %v248
    %306 = vmatpush.bf16.msra.mxu0 %v246
    %307 = vmatpush.bf16.msra.mxu0 %v244
    %308 = vmatpush.bf16.msra.mxu0 %v242
    %309 = vmatpush.bf16.msra.mxu0 %v240
    %310 = vmatmul.bf16.gmra.mxu0 %v125
    %v311 = vpop.f32.mrf.mxu0
    %v312 = vadd.f32 %v298, %v311
    %v313 = vpop.f32.mrf.mxu0
    %v314 = vadd.f32 %v300, %v313
    %315 = vdwg.mxu0
    %316 = vmatpush.bf16.msra.mxu0 %v239
    %317 = vmatpush.bf16.msra.mxu0 %v237
    %318 = vmatpush.bf16.msra.mxu0 %v235
    %319 = vmatpush.bf16.msra.mxu0 %v233
    %320 = vmatpush.bf16.msra.mxu0 %v231
    %321 = vmatpush.bf16.msra.mxu0 %v229
    %322 = vmatpush.bf16.msra.mxu0 %v227
    %323 = vmatpush.bf16.msra.mxu0 %v225
    %324 = vmatmul.bf16.gmra.mxu0 %v124
    %v325 = vpop.f32.mrf.mxu0
    %v326 = vadd.f32 0.0, %v325
    %v327 = vpop.f32.mrf.mxu0
    %v328 = vadd.f32 0.0, %v327
    %329 = vdwg.mxu0
    %330 = vmatpush.bf16.msra.mxu0 %v255
    %331 = vmatpush.bf16.msra.mxu0 %v253
    %332 = vmatpush.bf16.msra.mxu0 %v251
    %333 = vmatpush.bf16.msra.mxu0 %v249
    %334 = vmatpush.bf16.msra.mxu0 %v247
    %335 = vmatpush.bf16.msra.mxu0 %v245
    %336 = vmatpush.bf16.msra.mxu0 %v243
    %337 = vmatpush.bf16.msra.mxu0 %v241
    %338 = vmatmul.bf16.gmra.mxu0 %v125
    %v339 = vpop.f32.mrf.mxu0
    %v340 = vadd.f32 %v326, %v339
    %v341 = vpop.f32.mrf.mxu0
    %v342 = vadd.f32 %v328, %v341
    %343 = vdwg.mxu0
    %v344 = vadd.f32 %v82, %v312
    %v345 = vadd.f32 %v83, %v340
    %v346 = vadd.f32 %v84, %v314
    %v347 = vadd.f32 %v85, %v342
    %348 = vst [vmem:[#allocation2] sm:$0xff] %v344
    %349 = vst [vmem:[#allocation2 + $0x8] sm:$0xff] %v345
    %350 = vst [vmem:[#allocation2 + $0x10] sm:$0xff] %v346
    %351 = vst [vmem:[#allocation2 + $0x18] sm:$0xff] %v347
    // Predicated region
    $region42: #{_lambda_.1} parent=1 // pred_check
      %p352 = pneg %p56
    $region43: #{_lambda_.1} parent=1 // pred_check_branch
      %354 = sbr.rel (%p352) target = $region45
    $region44: #{_lambda_.1} parent=1 // pred_region
      %v355 = vld [vmem:[#allocation2] sm:$0xff]
      %v356 = vld [vmem:[#allocation2 + $0x8] sm:$0xff]
      %v357 = vld [vmem:[#allocation2 + $0x10] sm:$0xff]
      %v358 = vld [vmem:[#allocation2 + $0x18] sm:$0xff]
      %v359 = vadd.f32 %v355, %v357
      %v360 = vrot.slane %v359, 4
      %v361 = vadd.f32 %v359, %v360
      %v362 = vrot.slane %v361, 2
      %v363 = vadd.f32 %v361, %v362
      %v364 = vrot.slane %v363, 1
      %v365 = vadd.f32 %v363, %v364
      %v366 = vadd.f32 %v356, %v358
      %v367 = vrot.slane %v366, 4
      %v368 = vadd.f32 %v366, %v367
      %v369 = vrot.slane %v368, 2
      %v370 = vadd.f32 %v368, %v369
      %v371 = vrot.slane %v370, 1
      %v372 = vadd.f32 %v370, %v371
      %v373 = vmul.f32 %v365, 0.125
      %v374 = vmul.f32 %v372, 0.125
      %v375 = vsub.f32 %v355, %v373
      %v376 = vsub.f32 %v356, %v374
      %v377 = vsub.f32 %v357, %v373
      %v378 = vsub.f32 %v358, %v374
      %v379 = vlaneseq
      %v380 = vshrl.u32 %v379, 7
      %v381 = vadd.s32 %v380, 8
      %vm382 = vcmp.lt.s32.totalorder %v380, 8
      %vm383 = vcmp.lt.s32.totalorder %v381, 8
      %v384 = vsel %vm382, %v375, 0.0
      %v385 = vsel %vm382, %v376, 0.0
      %v386 = vsel %vm383, %v377, 0.0
      %v387 = vsel %vm383, %v378, 0.0
      %v388 = vmul.f32 %v384, %v384
      %v389 = vmul.f32 %v385, %v385
      %v390 = vmul.f32 %v386, %v386
      %v391 = vmul.f32 %v387, %v387
      %v392 = vadd.f32 %v388, %v390
      %v393 = vrot.slane %v392, 4
      %v394 = vadd.f32 %v392, %v393
      %v395 = vrot.slane %v394, 2
      %v396 = vadd.f32 %v394, %v395
      %v397 = vrot.slane %v396, 1
      %v398 = vadd.f32 %v396, %v397
      %v399 = vadd.f32 %v389, %v391
      %v400 = vrot.slane %v399, 4
      %v401 = vadd.f32 %v399, %v400
      %v402 = vrot.slane %v401, 2
      %v403 = vadd.f32 %v401, %v402
      %v404 = vrot.slane %v403, 1
      %v405 = vadd.f32 %v403, %v404
      %v406 = vmul.f32 %v398, 0.125
      %v407 = vmul.f32 %v405, 0.125
      %v408 = vld [vmem:[%s2] sm:$0x3]
      %v409 = vadd.f32 %v406, 1e-05
      %v410 = vadd.f32 %v407, 1e-05
      %v411 = vrsqrt.pop %v409
      %v412 = vmul.f32 %v411, %v409
      %v413 = vmul.f32 %v412, %v411
      %v414 = vmul.f32 0.5, %v413
      %v415 = vsub.f32 1.5, %v414
      %v416 = vmul.f32 %v411, %v415
      %vm417 = vweird.f32 %v409
      %vm418 = vweird.f32 %v411
      %vm419 = vmor %vm417, %vm418
      %v420 = vsel %vm419, %v411, %v416
      %v421 = vrsqrt.pop %v410
      %v422 = vmul.f32 %v421, %v410
      %v423 = vmul.f32 %v422, %v421
      %v424 = vmul.f32 0.5, %v423
      %v425 = vsub.f32 1.5, %v424
      %v426 = vmul.f32 %v421, %v425
      %vm427 = vweird.f32 %v410
      %vm428 = vweird.f32 %v421
      %vm429 = vmor %vm427, %vm428
      %v430 = vsel %vm429, %v421, %v426
      %v433 = vrot.slane %v430, 7
      %vm434 = vcmask 1040384
      %v435 = vsel %vm434, %v420, %v433
      %v437 = vmul.f32 %v408, %v435
      %v438 = vld [vmem:[%s3] sm:$0x3]
      %v440 = vperm.slane %v437, 0
      %v441 = vperm.slane %v437, 1
      %v444 = vmul.f32 %v373, %v440
      %v445 = vmul.f32 %v374, %v441
      %v448 = vrot.slane %v445, 7
      %v449 = vsel %vm434, %v444, %v448
      %v451 = vsub.f32 %v438, %v449
      %v452 = vmul.f32 %v355, %v440
      %v453 = vmul.f32 %v356, %v441
      %v454 = vmul.f32 %v357, %v440
      %v455 = vmul.f32 %v358, %v441
      %v457 = vperm.slane %v451, 0
      %v458 = vperm.slane %v451, 1
      %v461 = vadd.f32 %v452, %v457
      %v462 = vadd.f32 %v453, %v458
      %v463 = vadd.f32 %v454, %v457
      %v464 = vadd.f32 %v455, %v458
      %v465 = vmax.f32 %v461, 0.0
      %v466 = vmax.f32 %v462, 0.0
      %v467 = vmax.f32 %v463, 0.0
      %v468 = vmax.f32 %v464, 0.0
      %v469 = vld [vmem:[%s6] sm:$0xff]
      %v470 = vld [vmem:[%s6 + $0x8] sm:$0xff]
      %v471 = vld [vmem:[%s6 + $0x10] sm:$0xff]
      %v472 = vld [vmem:[%s6 + $0x18] sm:$0xff]
      %v473 = vpack.c.bf16 %v467, %v465
      %v474 = vpack.c.bf16 %v468, %v466
      %v475 = vld [vmem:[#allocation5] sm:$0xff]
      %v476 = vld [vmem:[#allocation5 + $0x8] sm:$0xff]
      %v477 = vld [vmem:[#allocation5 + $0x10] sm:$0xff]
      %v478 = vld [vmem:[#allocation5 + $0x18] sm:$0xff]
      %v479 = vld [vmem:[#allocation5 + $0x20] sm:$0xff]
      %v480 = vld [vmem:[#allocation5 + $0x28] sm:$0xff]
      %v481 = vld [vmem:[#allocation5 + $0x30] sm:$0xff]
      %v482 = vld [vmem:[#allocation5 + $0x38] sm:$0xff]
      %v483 = vld [vmem:[#allocation5 + $0x40] sm:$0xff]
      %v484 = vld [vmem:[#allocation5 + $0x48] sm:$0xff]
      %v485 = vld [vmem:[#allocation5 + $0x50] sm:$0xff]
      %v486 = vld [vmem:[#allocation5 + $0x58] sm:$0xff]
      %v487 = vld [vmem:[#allocation5 + $0x60] sm:$0xff]
      %v488 = vld [vmem:[#allocation5 + $0x68] sm:$0xff]
      %v489 = vld [vmem:[#allocation5 + $0x70] sm:$0xff]
      %v490 = vld [vmem:[#allocation5 + $0x78] sm:$0xff]
      %v491 = vld [vmem:[#allocation5 + $0x80] sm:$0xff]
      %v492 = vld [vmem:[#allocation5 + $0x88] sm:$0xff]
      %v493 = vld [vmem:[#allocation5 + $0x90] sm:$0xff]
      %v494 = vld [vmem:[#allocation5 + $0x98] sm:$0xff]
      %v495 = vld [vmem:[#allocation5 + $0xa0] sm:$0xff]
      %v496 = vld [vmem:[#allocation5 + $0xa8] sm:$0xff]
      %v497 = vld [vmem:[#allocation5 + $0xb0] sm:$0xff]
      %v498 = vld [vmem:[#allocation5 + $0xb8] sm:$0xff]
      %v499 = vld [vmem:[#allocation5 + $0xc0] sm:$0xff]
      %v500 = vld [vmem:[#allocation5 + $0xc8] sm:$0xff]
      %v501 = vld [vmem:[#allocation5 + $0xd0] sm:$0xff]
      %v502 = vld [vmem:[#allocation5 + $0xd8] sm:$0xff]
      %v503 = vld [vmem:[#allocation5 + $0xe0] sm:$0xff]
      %v504 = vld [vmem:[#allocation5 + $0xe8] sm:$0xff]
      %v505 = vld [vmem:[#allocation5 + $0xf0] sm:$0xff]
      %v506 = vld [vmem:[#allocation5 + $0xf8] sm:$0xff]
      %v539 = vunpack.c.l.b16 %v475
      %v540 = vunpack.c.h.b16 %v475
      %v541 = vunpack.c.l.b16 %v476
      %v542 = vunpack.c.h.b16 %v476
      %v543 = vunpack.c.l.b16 %v477
      %v544 = vunpack.c.h.b16 %v477
      %v545 = vunpack.c.l.b16 %v478
      %v546 = vunpack.c.h.b16 %v478
      %v547 = vunpack.c.l.b16 %v479
      %v548 = vunpack.c.h.b16 %v479
      %v549 = vunpack.c.l.b16 %v480
      %v550 = vunpack.c.h.b16 %v480
      %v551 = vunpack.c.l.b16 %v481
      %v552 = vunpack.c.h.b16 %v481
      %v553 = vunpack.c.l.b16 %v482
      %v554 = vunpack.c.h.b16 %v482
      %v555 = vunpack.c.l.b16 %v483
      %v556 = vunpack.c.h.b16 %v483
      %v557 = vunpack.c.l.b16 %v484
      %v558 = vunpack.c.h.b16 %v484
      %v559 = vunpack.c.l.b16 %v485
      %v560 = vunpack.c.h.b16 %v485
      %v561 = vunpack.c.l.b16 %v486
      %v562 = vunpack.c.h.b16 %v486
      %v563 = vunpack.c.l.b16 %v487
      %v564 = vunpack.c.h.b16 %v487
      %v565 = vunpack.c.l.b16 %v488
      %v566 = vunpack.c.h.b16 %v488
      %v567 = vunpack.c.l.b16 %v489
      %v568 = vunpack.c.h.b16 %v489
      %v569 = vunpack.c.l.b16 %v490
      %v570 = vunpack.c.h.b16 %v490
      %v571 = vunpack.c.l.b16 %v491
      %v572 = vunpack.c.h.b16 %v491
      %v573 = vunpack.c.l.b16 %v492
      %v574 = vunpack.c.h.b16 %v492
      %v575 = vunpack.c.l.b16 %v493
      %v576 = vunpack.c.h.b16 %v493
      %v577 = vunpack.c.l.b16 %v494
      %v578 = vunpack.c.h.b16 %v494
      %v579 = vunpack.c.l.b16 %v495
      %v580 = vunpack.c.h.b16 %v495
      %v581 = vunpack.c.l.b16 %v496
      %v582 = vunpack.c.h.b16 %v496
      %v583 = vunpack.c.l.b16 %v497
      %v584 = vunpack.c.h.b16 %v497
      %v585 = vunpack.c.l.b16 %v498
      %v586 = vunpack.c.h.b16 %v498
      %v587 = vunpack.c.l.b16 %v499
      %v588 = vunpack.c.h.b16 %v499
      %v589 = vunpack.c.l.b16 %v500
      %v590 = vunpack.c.h.b16 %v500
      %v591 = vunpack.c.l.b16 %v501
      %v592 = vunpack.c.h.b16 %v501
      %v593 = vunpack.c.l.b16 %v502
      %v594 = vunpack.c.h.b16 %v502
      %v595 = vunpack.c.l.b16 %v503
      %v596 = vunpack.c.h.b16 %v503
      %v597 = vunpack.c.l.b16 %v504
      %v598 = vunpack.c.h.b16 %v504
      %v599 = vunpack.c.l.b16 %v505
      %v600 = vunpack.c.h.b16 %v505
      %v601 = vunpack.c.l.b16 %v506
      %v602 = vunpack.c.h.b16 %v506
      %v603 = vpack.c.b16 %v541, %v539
      %v604 = vpack.c.b16 %v542, %v540
      %v605 = vpack.c.b16 %v545, %v543
      %v606 = vpack.c.b16 %v546, %v544
      %v607 = vpack.c.b16 %v549, %v547
      %v608 = vpack.c.b16 %v550, %v548
      %v609 = vpack.c.b16 %v553, %v551
      %v610 = vpack.c.b16 %v554, %v552
      %v611 = vpack.c.b16 %v557, %v555
      %v612 = vpack.c.b16 %v558, %v556
      %v613 = vpack.c.b16 %v561, %v559
      %v614 = vpack.c.b16 %v562, %v560
      %v615 = vpack.c.b16 %v565, %v563
      %v616 = vpack.c.b16 %v566, %v564
      %v617 = vpack.c.b16 %v569, %v567
      %v618 = vpack.c.b16 %v570, %v568
      %v619 = vpack.c.b16 %v573, %v571
      %v620 = vpack.c.b16 %v574, %v572
      %v621 = vpack.c.b16 %v577, %v575
      %v622 = vpack.c.b16 %v578, %v576
      %v623 = vpack.c.b16 %v581, %v579
      %v624 = vpack.c.b16 %v582, %v580
      %v625 = vpack.c.b16 %v585, %v583
      %v626 = vpack.c.b16 %v586, %v584
      %v627 = vpack.c.b16 %v589, %v587
      %v628 = vpack.c.b16 %v590, %v588
      %v629 = vpack.c.b16 %v593, %v591
      %v630 = vpack.c.b16 %v594, %v592
      %v631 = vpack.c.b16 %v597, %v595
      %v632 = vpack.c.b16 %v598, %v596
      %v633 = vpack.c.b16 %v601, %v599
      %v634 = vpack.c.b16 %v602, %v600
      %667 = vmatpush.bf16.msra.mxu0 %v617
      %668 = vmatpush.bf16.msra.mxu0 %v615
      %669 = vmatpush.bf16.msra.mxu0 %v613
      %670 = vmatpush.bf16.msra.mxu0 %v611
      %671 = vmatpush.bf16.msra.mxu0 %v609
      %672 = vmatpush.bf16.msra.mxu0 %v607
      %673 = vmatpush.bf16.msra.mxu0 %v605
      %674 = vmatpush.bf16.msra.mxu0 %v603
      %675 = vmatmul.bf16.gmra.mxu0 %v473
      %v676 = vpop.f32.mrf.mxu0
      %v677 = vadd.f32 0.0, %v676
      %v678 = vpop.f32.mrf.mxu0
      %v679 = vadd.f32 0.0, %v678
      %680 = vdwg.mxu0
      %681 = vmatpush.bf16.msra.mxu0 %v633
      %682 = vmatpush.bf16.msra.mxu0 %v631
      %683 = vmatpush.bf16.msra.mxu0 %v629
      %684 = vmatpush.bf16.msra.mxu0 %v627
      %685 = vmatpush.bf16.msra.mxu0 %v625
      %686 = vmatpush.bf16.msra.mxu0 %v623
      %687 = vmatpush.bf16.msra.mxu0 %v621
      %688 = vmatpush.bf16.msra.mxu0 %v619
      %689 = vmatmul.bf16.gmra.mxu0 %v474
      %v690 = vpop.f32.mrf.mxu0
      %v691 = vadd.f32 %v677, %v690
      %v692 = vpop.f32.mrf.mxu0
      %v693 = vadd.f32 %v679, %v692
      %694 = vdwg.mxu0
      %695 = vmatpush.bf16.msra.mxu0 %v618
      %696 = vmatpush.bf16.msra.mxu0 %v616
      %697 = vmatpush.bf16.msra.mxu0 %v614
      %698 = vmatpush.bf16.msra.mxu0 %v612
      %699 = vmatpush.bf16.msra.mxu0 %v610
      %700 = vmatpush.bf16.msra.mxu0 %v608
      %701 = vmatpush.bf16.msra.mxu0 %v606
      %702 = vmatpush.bf16.msra.mxu0 %v604
      %703 = vmatmul.bf16.gmra.mxu0 %v473
      %v704 = vpop.f32.mrf.mxu0
      %v705 = vadd.f32 0.0, %v704
      %v706 = vpop.f32.mrf.mxu0
      %v707 = vadd.f32 0.0, %v706
      %708 = vdwg.mxu0
      %709 = vmatpush.bf16.msra.mxu0 %v634
      %710 = vmatpush.bf16.msra.mxu0 %v632
      %711 = vmatpush.bf16.msra.mxu0 %v630
      %712 = vmatpush.bf16.msra.mxu0 %v628
      %713 = vmatpush.bf16.msra.mxu0 %v626
      %714 = vmatpush.bf16.msra.mxu0 %v624
      %715 = vmatpush.bf16.msra.mxu0 %v622
      %716 = vmatpush.bf16.msra.mxu0 %v620
      %717 = vmatmul.bf16.gmra.mxu0 %v474
      %v718 = vpop.f32.mrf.mxu0
      %v719 = vadd.f32 %v705, %v718
      %v720 = vpop.f32.mrf.mxu0
      %v721 = vadd.f32 %v707, %v720
      %722 = vdwg.mxu0
      %v723 = vadd.f32 %v469, %v691
      %v724 = vadd.f32 %v470, %v719
      %v725 = vadd.f32 %v471, %v693
      %v726 = vadd.f32 %v472, %v721
      %727 = vst [vmem:[%s6] sm:$0xff] %v723
      %728 = vst [vmem:[%s6 + $0x8] sm:$0xff] %v724
      %729 = vst [vmem:[%s6 + $0x10] sm:$0xff] %v725
      %730 = vst [vmem:[%s6 + $0x18] sm:$0xff] %v726
    $region45: #{_lambda_.1} parent=1 // pred_fallthru
      _
    // Predicated region
    $region46: #{_lambda_.1} parent=1 // pred_check
      _
    $region47: #{_lambda_.1} parent=1 // pred_check_branch
      %732 = sbr.rel (0) target = $region49
    $region48: #{_lambda_.1} parent=1 // pred_region
      _
    $region49: #{_lambda_.1} parent=1 // pred_fallthru
      _
    // Predicated region
    $region50: #{_lambda_.1} parent=1 // pred_check
      _
    $region51: #{_lambda_.1} parent=1 // pred_check_branch
      %734 = sbr.rel (0) target = $region53
    $region52: #{_lambda_.1} parent=1 // pred_region
      _
    $region53: #{_lambda_.1} parent=1 // pred_fallthru
      _
    %735 = vsyncpa [#allocation4], 1
    %736 = vsyncpa [#allocation6], 1

</llo_original>
